<compile_context>
chip_gen: v7x
topology: tpu7x:2x2x1
jax: 0.10.0
libtpu: 0.0.40
codegen_flags: <defaults>
</compile_context>

<pallas_src>
import functools

import jax
import jax.numpy as jnp
from jax import lax
from jax.experimental import pallas as pl
from jax.experimental.pallas import tpu as pltpu

EPS = 1e-12                      # matches torch F.normalize default eps
_NT = (((1,), (1,)), ((), ()))   # contract feature dims: x[B,F] . w[C,F] -> [B,C]
_VMEM_LIMIT = 48 * 1024 * 1024   # explicit scoped-VMEM cap (safe on v5e/v6e/v7x)
_SMEM_SPEC = pl.BlockSpec(memory_space=pltpu.MemorySpace.SMEM)


# ---------------- helpers ----------------

def _round_up(x, m):
    return ((x + m - 1) // m) * m


def _sublane(dtype):
    return {4: 8, 2: 16, 1: 32}.get(jnp.dtype(dtype).itemsize, 8)


def _pick_tiles(B, C, F, dtype, tb_pref=256, tc_pref=512, tk_pref=512):
    """Lane/sublane-aligned tiles, padded output sizes, and K step count."""
    sub = _sublane(dtype)
    tB = min(tb_pref, _round_up(B, sub))        # sublane multiple
    tC = min(tc_pref, _round_up(C, 128))        # lane multiple -> unmasked stores
    tK = F if F <= 2 * tk_pref else tk_pref     # single K step for moderate F
    Bp = _round_up(B, tB)
    Cp = _round_up(C, tC)
    nK = pl.cdiv(F, tK)
    return tB, tC, tK, Bp, Cp, nK


def _mask_cols(v, rem):
    """Zero columns >= rem (handles ragged last K tile; garbage-safe)."""
    idx = lax.broadcasted_iota(jnp.int32, v.shape, dimension=1)
    return jnp.where(idx < rem, v, jnp.zeros_like(v))


def _inv_temp(temperature):
    return (1.0 / jnp.asarray(temperature, jnp.float32)).reshape(1, 1)


# ---------------- kernels ----------------

def _linear_kernel(inv_t_ref, x_ref, w_ref, b_ref, o_ref, acc_ref, *,
                   f_total, t_k, relu, mask_k):
    # x_ref: [tB, tK], w_ref: [tC, tK] (torch layout), b_ref: [1, tC]
    k = pl.program_id(2)

    @pl.when(k == 0)
    def _init():
        acc_ref[...] = jnp.zeros_like(acc_ref)

    x = x_ref[...]
    w = w_ref[...]
    if mask_k:                       # static flag: only emitted when F % tK != 0
        rem = f_total - k * t_k
        x = _mask_cols(x, rem)
        w = _mask_cols(w, rem)
    acc_ref[...] += lax.dot_general(x, w, _NT, preferred_element_type=jnp.float32)

    @pl.when(k == pl.num_programs(2) - 1)
    def _fin():
        out = acc_ref[...] + b_ref[...]
        if relu:
            out = jnp.maximum(out, 0.0)
        o_ref[...] = (out * inv_t_ref[0, 0]).astype(o_ref.dtype)


def _proto_norm_kernel(inv_t_ref, x_ref, p_ref, o_ref, acc_ref, psq_ref, *,
                       f_total, t_k, mask_k):
    # x_ref is already L2-normalized (wrapper).  Prototypes stream raw from HBM;
    # their squared norms are accumulated here and applied as a per-column
    # rsqrt scale at finalize:  xn @ (p/||p||).T == (xn @ p.T) * 1/||p||.
    k = pl.program_id(2)

    @pl.when(k == 0)
    def _init():
        acc_ref[...] = jnp.zeros_like(acc_ref)
        psq_ref[...] = jnp.zeros_like(psq_ref)

    x = x_ref[...]
    p = p_ref[...]
    if mask_k:
        rem = f_total - k * t_k
        x = _mask_cols(x, rem)
        p = _mask_cols(p, rem)
    acc_ref[...] += lax.dot_general(x, p, _NT, preferred_element_type=jnp.float32)

    p32 = p.astype(jnp.float32)
    ones = jnp.ones((1, p32.shape[1]), jnp.float32)
    # (1, tK) . (tC, tK)^T -> (1, tC): lane-shaped norm accumulation, no relayout.
    psq_ref[...] += lax.dot_general(ones, p32 * p32, _NT,
                                    preferred_element_type=jnp.float32)

    @pl.when(k == pl.num_programs(2) - 1)
    def _fin():
        # max(||p||, eps) == sqrt(max(||p||^2, eps^2)) -> matches F.normalize.
        inv_pn = lax.rsqrt(jnp.maximum(psq_ref[...], EPS * EPS))   # (1, tC)
        o_ref[...] = (acc_ref[...] * inv_pn * inv_t_ref[0, 0]).astype(o_ref.dtype)


# ---------------- generic fused linear (bias [+relu], * 1/T) ----------------

def _fused_linear(x, w, b, inv_t, *, relu=False, out_dtype=jnp.float32,
                  tb=256, tc=512, tk=512):
    """x: [B,F], w: [C,F] (torch nn.Linear layout), b: [C] -> [B,C]."""
    B, F = x.shape
    C = w.shape[0]
    tB, tC, tK, Bp, Cp, nK = _pick_tiles(B, C, F, x.dtype, tb, tc, tk)
    mask_k = (F % tK) != 0
    kern = functools.partial(_linear_kernel, f_total=F, t_k=tK,
                             relu=relu, mask_k=mask_k)
    out = pl.pallas_call(
        kern,
        out_shape=jax.ShapeDtypeStruct((Bp, Cp), out_dtype),
        grid=(Bp // tB, Cp // tC, nK),
        in_specs=[
            _SMEM_SPEC,                                        # 1/T scalar
            pl.BlockSpec((tB, tK), lambda i, j, k: (i, k)),    # activations (K stream)
            pl.BlockSpec((tC, tK), lambda i, j, k: (j, k)),    # weights (C,K stream)
            pl.BlockSpec((1, tC), lambda i, j, k: (0, j)),     # per-tile bias
        ],
        out_specs=pl.BlockSpec((tB, tC), lambda i, j, k: (i, j)),
        scratch_shapes=[pltpu.VMEM((tB, tC), jnp.float32)],    # f32 accumulator
        compiler_params=pltpu.CompilerParams(
            dimension_semantics=("parallel", "parallel", "arbitrary"),
            vmem_limit_bytes=_VMEM_LIMIT),
    )(inv_t, x, w, b.reshape(1, C))
    if (Bp, Cp) != (B, C):
        out = out[:B, :C]
    return out


# ---------------- public wrappers (ClassifierHead variants) ----------------

def classifier_head_linear(x, w, b, temperature=1.0):
    """classifier_type='linear':  (x @ w.T + b) / T."""
    return _fused_linear(x, w, b, _inv_temp(temperature), relu=False)


def classifier_head_mlp(x, w1, b1, w2, b2, temperature=1.0):
    """classifier_type='mlp':  (relu(x @ w1.T + b1) @ w2.T + b2) / T.

    Two pallas_calls: no (H, F) weight block stays resident in VMEM, and both
    grids parallelize over B and the output dim (v7x megacore friendly).
    Dropout is identity at inference (p applied only in training) -> omitted.
    """
    one = jnp.ones((1, 1), jnp.float32)
    h = _fused_linear(x, w1, b1, one, relu=True)                  # [B, H] f32
    return _fused_linear(h, w2, b2, _inv_temp(temperature), relu=False)


def classifier_head_prototypical(x, prototypes, temperature=1.0, *, normalize=True,
                                 prototypes_initialized=True,
                                 tb=256, tc=512, tk=512):
    """classifier_type='prototypical':  cosine / dot similarity to prototypes / T."""
    B, F = x.shape
    C = prototypes.shape[0]
    if not prototypes_initialized:
        # PyTorch path: zeros without touching prototypes.
        return jnp.zeros((B, C), jnp.float32)
    inv_t = _inv_temp(temperature)

    if not normalize:
        # Plain x @ P.T / T == fused linear with a zero bias.
        return _fused_linear(x, prototypes, jnp.zeros((C,), jnp.float32), inv_t)

    # Activations normalized once here (B*F is small); prototype norms are
    # accumulated inside the kernel so prototypes stream from HBM exactly once.
    x32 = x.astype(jnp.float32)
    xn = (x32 * lax.rsqrt(jnp.maximum(jnp.sum(x32 * x32, axis=1, keepdims=True),
                                      EPS * EPS))).astype(x.dtype)

    tB, tC, tK, Bp, Cp, nK = _pick_tiles(B, C, F, x.dtype, tb, tc, tk)
    mask_k = (F % tK) != 0
    kern = functools.partial(_proto_norm_kernel, f_total=F, t_k=tK, mask_k=mask_k)
    out = pl.pallas_call(
        kern,
        out_shape=jax.ShapeDtypeStruct((Bp, Cp), jnp.float32),
        grid=(Bp // tB, Cp // tC, nK),
        in_specs=[
            _SMEM_SPEC,
            pl.BlockSpec((tB, tK), lambda i, j, k: (i, k)),    # normalized activations
            pl.BlockSpec((tC, tK), lambda i, j, k: (j, k)),    # raw prototypes
        ],
        out_specs=pl.BlockSpec((tB, tC), lambda i, j, k: (i, j)),
        scratch_shapes=[pltpu.VMEM((tB, tC), jnp.float32),     # logits accumulator
                        pltpu.VMEM((1, tC), jnp.float32)],     # prototype sq-norms
        compiler_params=pltpu.CompilerParams(
            dimension_semantics=("parallel", "parallel", "arbitrary"),
            vmem_limit_bytes=_VMEM_LIMIT),
    )(inv_t, xn, prototypes)
    if (Bp, Cp) != (B, C):
        out = out[:B, :C]
    return out


# ---------------- demo / self-check ----------------

if __name__ == "__main__":
    key = jax.random.PRNGKey(0)
    B, F_DIM, H_DIM, C = 8, 32, 64, 16
    temperature = 2.0

    k = jax.random.split(key, 10)
    x = jax.random.normal(k[0], (B, F_DIM), jnp.float32)

    # deterministic "parameters" (shapes per ClassifierHead.__init__)
    w_lin = jax.random.normal(k[1], (C, F_DIM), jnp.float32) * 0.05
    b_lin = jax.random.normal(k[2], (C,), jnp.float32) * 0.05
    w1 = jax.random.normal(k[3], (H_DIM, F_DIM), jnp.float32) * 0.05
    b1 = jax.random.normal(k[4], (H_DIM,), jnp.float32) * 0.05
    w2 = jax.random.normal(k[5], (C, H_DIM), jnp.float32) * 0.05
    b2 = jax.random.normal(k[6], (C,), jnp.float32) * 0.05
    prototypes = jax.random.normal(k[7], (C, F_DIM), jnp.float32)

    # --- linear (default classifier_type) ---
    out_lin = jax.block_until_ready(
        classifier_head_linear(x, w_lin, b_lin, temperature))
    ref_lin = (x @ w_lin.T + b_lin) / temperature
    assert jnp.allclose(out_lin, ref_lin, atol=1e-4), "linear mismatch"

    # --- linear with large, non-tile-aligned in_features (exercises K tiling
    #     + in-kernel ragged-K masking, no wrapper padding of the weights) ---
    F_BIG = 1152
    x_big = jax.random.normal(k[8], (B, F_BIG), jnp.float32) * 0.1
    w_big = jax.random.normal(k[9], (C, F_BIG), jnp.float32) * 0.05
    out_big = jax.block_until_ready(
        classifier_head_linear(x_big, w_big, b_lin, temperature))
    ref_big = (x_big @ w_big.T + b_lin) / temperature
    assert jnp.allclose(out_big, ref_big, atol=1e-4), "linear (K-tiled) mismatch"

    # --- mlp ---
    out_mlp = jax.block_until_ready(
        classifier_head_mlp(x, w1, b1, w2, b2, temperature))
    ref_mlp = (jnp.maximum(x @ w1.T + b1, 0.0) @ w2.T + b2) / temperature
    assert jnp.allclose(out_mlp, ref_mlp, atol=1e-4), "mlp mismatch"

    # --- prototypical (normalize=True, prototypes initialized) ---
    out_proto = jax.block_until_ready(
        classifier_head_prototypical(x, prototypes, temperature, normalize=True))
    xn_r = x / jnp.maximum(jnp.linalg.norm(x, axis=1, keepdims=True), EPS)
    pn_r = prototypes / jnp.maximum(
        jnp.linalg.norm(prototypes, axis=1, keepdims=True), EPS)
    ref_proto = (xn_r @ pn_r.T) / temperature
    assert jnp.allclose(out_proto, ref_proto, atol=1e-4), "prototypical mismatch"

    # --- prototypical (normalize=False) ---
    out_nonorm = jax.block_until_ready(
        classifier_head_prototypical(x, prototypes, temperature, normalize=False))
    ref_nonorm = (x @ prototypes.T) / temperature
    assert jnp.allclose(out_nonorm, ref_nonorm, atol=1e-4), "proto(no-norm) mismatch"

    # --- prototypical (uninitialized -> zeros, as in PyTorch) ---
    out_uninit = classifier_head_prototypical(
        x, prototypes, temperature, prototypes_initialized=False)
    assert out_uninit.shape == (B, C) and not bool(out_uninit.any())

    print("KERNEL_OK")
</pallas_src>

<mosaic_0001>
module attributes {stable_mosaic.version = 11 : i64} {
  func.func @_linear_kernel(%arg0: i32, %arg1: i32, %arg2: i32, %arg3: memref<1x1xf32, #tpu.memory_space<smem>>, %arg4: memref<8x32xf32, #tpu.memory_space<vmem>>, %arg5: memref<128x32xf32, #tpu.memory_space<vmem>>, %arg6: memref<1x128xf32, #tpu.memory_space<vmem>>, %arg7: memref<8x128xf32, #tpu.memory_space<vmem>>, %arg8: memref<8x128xf32, #tpu.memory_space<vmem>>) attributes {dimension_semantics = [#tpu.dimension_semantics<parallel>, #tpu.dimension_semantics<parallel>, #tpu.dimension_semantics<arbitrary>], iteration_bounds = array<i64: 1, 1, 1>, scalar_prefetch = 0 : i64, scratch_operands = 1 : i64, tpu.core_type = #tpu.core_type<tc>, window_params = [{transform_indices = @transform_0, window_bounds = array<i64: 1, 1>}, {transform_indices = @transform_1, window_bounds = array<i64: 8, 32>}, {transform_indices = @transform_2, window_bounds = array<i64: 128, 32>}, {transform_indices = @transform_3, window_bounds = array<i64: 1, 128>}, {transform_indices = @transform_4, window_bounds = array<i64: 8, 128>}]} {
    %c0_i32 = arith.constant 0 : i32
    %0 = arith.cmpi eq, %arg2, %c0_i32 : i32
    %1 = arith.extui %0 : i1 to i32
    %c0_i32_0 = arith.constant 0 : i32
    %2 = arith.cmpi ne, %1, %c0_i32_0 : i32
    scf.if %2 {
      %cst_10 = arith.constant 0.000000e+00 : f32
      %12 = vector.broadcast %cst_10 : f32 to vector<8x128xf32>
      %c0_11 = arith.constant 0 : index
      %c0_12 = arith.constant 0 : index
      %13 = vector.load %arg8[%c0_11, %c0_12] : memref<8x128xf32, #tpu.memory_space<vmem>>, vector<8x128xf32>
      tpu.vector_store %arg8[%c0_11, %c0_12], %12 {strides = array<i32>} : memref<8x128xf32, #tpu.memory_space<vmem>>, vector<8x128xf32>,
    } else {
    }
    %c0 = arith.constant 0 : index
    %c0_1 = arith.constant 0 : index
    %3 = vector.load %arg4[%c0, %c0_1] : memref<8x32xf32, #tpu.memory_space<vmem>>, vector<8x32xf32>
    %c0_2 = arith.constant 0 : index
    %c0_3 = arith.constant 0 : index
    %4 = vector.load %arg5[%c0_2, %c0_3] : memref<128x32xf32, #tpu.memory_space<vmem>>, vector<128x32xf32>
    %c0_4 = arith.constant 0 : index
    %c0_5 = arith.constant 0 : index
    %5 = vector.load %arg8[%c0_4, %c0_5] : memref<8x128xf32, #tpu.memory_space<vmem>>, vector<8x128xf32>
    %cst = arith.constant dense<0.000000e+00> : vector<8x128xf32>
    %6 = tpu.matmul %3, %4, %cst {dimension_numbers = #tpu.dot_dimension_numbers<[1], [1], [0], [0], [0, 0, 1, 0], [], []>} : vector<8x32xf32>, vector<128x32xf32>, vector<8x128xf32> -> vector<8x128xf32>
    %7 = arith.addf %5, %6 : vector<8x128xf32>
    %c0_6 = arith.constant 0 : index
    %c0_7 = arith.constant 0 : index
    %8 = vector.load %arg8[%c0_6, %c0_7] : memref<8x128xf32, #tpu.memory_space<vmem>>, vector<8x128xf32>
    tpu.vector_store %arg8[%c0_6, %c0_7], %7 {strides = array<i32>} : memref<8x128xf32, #tpu.memory_space<vmem>>, vector<8x128xf32>,
    %c0_i32_8 = arith.constant 0 : i32
    %9 = arith.cmpi eq, %arg2, %c0_i32_8 : i32
    %10 = arith.extui %9 : i1 to i32
    %c0_i32_9 = arith.constant 0 : i32
    %11 = arith.cmpi ne, %10, %c0_i32_9 : i32
    scf.if %11 {
      %c0_10 = arith.constant 0 : index
      %c0_11 = arith.constant 0 : index
      %12 = vector.load %arg8[%c0_10, %c0_11] : memref<8x128xf32, #tpu.memory_space<vmem>>, vector<8x128xf32>
      %c0_12 = arith.constant 0 : index
      %c0_13 = arith.constant 0 : index
      %13 = vector.load %arg6[%c0_12, %c0_13] : memref<1x128xf32, #tpu.memory_space<vmem>>, vector<1x128xf32>
      %14 = vector.broadcast %13 : vector<1x128xf32> to vector<8x128xf32>
      %15 = arith.addf %12, %14 : vector<8x128xf32>
      %c0_14 = arith.constant 0 : index
      %c0_15 = arith.constant 0 : index
      %16 = memref.load %arg3[%c0_14, %c0_15] : memref<1x1xf32, #tpu.memory_space<smem>>
      %17 = vector.broadcast %16 : f32 to vector<8x128xf32>
      %18 = arith.mulf %15, %17 : vector<8x128xf32>
      %c0_16 = arith.constant 0 : index
      %c0_17 = arith.constant 0 : index
      %19 = vector.load %arg7[%c0_16, %c0_17] : memref<8x128xf32, #tpu.memory_space<vmem>>, vector<8x128xf32>
      tpu.vector_store %arg7[%c0_16, %c0_17], %18 {strides = array<i32>} : memref<8x128xf32, #tpu.memory_space<vmem>>, vector<8x128xf32>,
    } else {
    }
    return
  }
  func.func @transform_0(%arg0: i32, %arg1: i32, %arg2: i32) -> (i32, i32) {
    %c0_i32 = arith.constant 0 : i32
    %c0_i32_0 = arith.constant 0 : i32
    %c0_i32_1 = arith.constant 0 : i32
    return %c0_i32, %c0_i32_0 : i32, i32
  }
  func.func @transform_1(%arg0: i32, %arg1: i32, %arg2: i32) -> (i32, i32) {
    %c0_i32 = arith.constant 0 : i32
    return %arg0, %arg2 : i32, i32
  }
  func.func @transform_2(%arg0: i32, %arg1: i32, %arg2: i32) -> (i32, i32) {
    %c0_i32 = arith.constant 0 : i32
    return %arg1, %arg2 : i32, i32
  }
  func.func @transform_3(%arg0: i32, %arg1: i32, %arg2: i32) -> (i32, i32) {
    %c0_i32 = arith.constant 0 : i32
    %c0_i32_0 = arith.constant 0 : i32
    return %c0_i32, %arg1 : i32, i32
  }
  func.func @transform_4(%arg0: i32, %arg1: i32, %arg2: i32) -> (i32, i32) {
    %c0_i32 = arith.constant 0 : i32
    return %arg0, %arg1 : i32, i32
  }
}

</mosaic_0001>

<llo_original>
// kernel: tpu_custom_call.1
$region0: #{tpu_custom_call.1}
  #allocation0 [shape = 'u32[]', space=smem, size = 0x4, offset = 0x4, fixed_abs, tag = 'smem constant byte address 0x4 - core index']
  #allocation1 [shape = 'u32[144,128]{1,0:T(1,128)}', space=vmem, size = 0x12000, scoped, tag = 'internal scratch']
  #allocation2 [shape = 'f32[8,128]{1,0:T(8,128)}', space=vmem, size = 0x1000, scoped, tag = 'scratch operand']
  #allocation3 [shape = 'f32[1,1]{1,0:T(1,128)S(6)}', space=smem, size = 0x200, scoped, tag = 'scoped memory for tpu_custom_call.1']
  %s0 = inlined_call_operand.<no memory space> [shape: f32[1,1], index: 0, kind: input, shape index: {}]
  %s1 = inlined_call_operand.hbm [shape: f32[8,32], index: 1, kind: input, shape index: {}]
  %s2 = inlined_call_operand.hbm [shape: f32[16,32], index: 2, kind: input, shape index: {}]
  %s3 = inlined_call_operand.vmem [shape: f32[1,16], index: 3, kind: input, shape index: {}]
  %s4 = inlined_call_operand.hbm [shape: f32[8,128], index: 4, kind: output, shape index: {}]
  %s5 = sld [smem:[#allocation0]]
  $region42: #{tpu_custom_call.1} parent=0
    _
  %s7 = ssub.s32 1, %s5
  %s8 = scalar_select 0, %s7, %s5
  %9 = sst [smem:[#allocation3]] %s0
  $region1: #{tpu_custom_call.1} parent=0
    #allocation4 [shape = 'u8[4096]{0}', space=vmem, size = 0x1000, scoped, tag = 'input window, operand 1, single buffered']
    #allocation5 [shape = 's32[1]{0}', space=sflag, size = 0x4, scoped, tag = 'scoped memory for tpu_custom_call.1']
    #allocation6 [shape = 's32[1]{0}', space=sflag, size = 0x4, scoped, tag = 'scoped memory for tpu_custom_call.1']
    #allocation7 [shape = 'u8[65536]{0}', space=vmem, size = 0x10000, scoped, tag = 'input window, operand 2, single buffered']
    #allocation8 [shape = 's32[1]{0}', space=sflag, size = 0x4, scoped, tag = 'scoped memory for tpu_custom_call.1']
    #allocation9 [shape = 'u8[4096]{0}', space=vmem, size = 0x1000, scoped, tag = 'output window, operand 0, single buffered']
    %10 = vsyncpa [#allocation5], 0
    %11 = vsyncpa [#allocation8], 0
    %12 = vsyncpa [#allocation6], 0
    // Predicated region
    $region2: #{tpu_custom_call.1} parent=1 // pred_check
      _
    $region3: #{tpu_custom_call.1} parent=1 // pred_check_branch
      %14 = sbr.rel (0) target = $region5
    $region4: #{tpu_custom_call.1} parent=1 // pred_region
      _
    $region5: #{tpu_custom_call.1} parent=1 // pred_fallthru
      _
    // Predicated region
    $region6: #{tpu_custom_call.1} parent=1 // pred_check
      _
    $region7: #{tpu_custom_call.1} parent=1 // pred_check_branch
      %16 = sbr.rel (0) target = $region9
    $region8: #{tpu_custom_call.1} parent=1 // pred_region
      %s18 = ssub.s32 128, 128
      %19 = vsyncadd [#allocation5], %s18
      %s21 = sshll.u32 [#allocation4], 4
      %s22 = int_to_ptr.vmem [resolvable:$true] %s21
      %24 = dma.hbm_to_vmem [thread:$0]  %s1, 128, %s22, [#allocation5]
    $region9: #{tpu_custom_call.1} parent=1 // pred_fallthru
      _
    // Predicated region
    $region10: #{tpu_custom_call.1} parent=1 // pred_check
      _
    $region11: #{tpu_custom_call.1} parent=1 // pred_check_branch
      %26 = sbr.rel (0) target = $region13
    $region12: #{tpu_custom_call.1} parent=1 // pred_region
      %s28 = ssub.s32 2048, 256
      %29 = vsyncadd [#allocation8], %s28
      %s30 = sshll.u32 [#allocation7], 4
      %s31 = int_to_ptr.vmem [resolvable:$true] %s30
      %36 = dma.hbm_to_vmem [thread:$0]  %s2, 256, %s31, [#allocation8], 128, 128, 8
    $region13: #{tpu_custom_call.1} parent=1 // pred_fallthru
      _
    // Predicated region
    $region14: #{tpu_custom_call.1} parent=1 // pred_check
      _
    $region15: #{tpu_custom_call.1} parent=1 // pred_check_branch
      %38 = sbr.rel (0) target = $region17
    $region16: #{tpu_custom_call.1} parent=1 // pred_region
      _
    $region17: #{tpu_custom_call.1} parent=1 // pred_fallthru
      _
    // Predicated region
    $region18: #{tpu_custom_call.1} parent=1 // pred_check
      _
    $region19: #{tpu_custom_call.1} parent=1 // pred_check_branch
      %40 = sbr.rel (0) target = $region21
    $region20: #{tpu_custom_call.1} parent=1 // pred_region
      %41 = dma.done [#allocation5], 128
    $region21: #{tpu_custom_call.1} parent=1 // pred_fallthru
      _
    // Predicated region
    $region22: #{tpu_custom_call.1} parent=1 // pred_check
      _
    $region23: #{tpu_custom_call.1} parent=1 // pred_check_branch
      %43 = sbr.rel (0) target = $region25
    $region24: #{tpu_custom_call.1} parent=1 // pred_region
      %44 = dma.done [#allocation8], 2048
    $region25: #{tpu_custom_call.1} parent=1 // pred_fallthru
      _
    %p45 = scmp.eq.s32.totalorder 0, 0
    // Predicated region
    $region26: #{tpu_custom_call.1} parent=1 // pred_check
      %p46 = pneg %p45
    $region27: #{tpu_custom_call.1} parent=1 // pred_check_branch
      %48 = sbr.rel (%p46) target = $region29
    $region28: #{tpu_custom_call.1} parent=1 // pred_region
      %49 = vst [vmem:[#allocation2] sm:$0xff] 0.0
    $region29: #{tpu_custom_call.1} parent=1 // pred_fallthru
      _
    %v50 = vld [vmem:[#allocation4] sm:$0xff]
    %v51 = vld [vmem:[#allocation7] sm:$0xff]
    %v52 = vld [vmem:[#allocation7 + $0x8] sm:$0xff]
    %v53 = vld [vmem:[#allocation7 + $0x10] sm:$0xff]
    %v54 = vld [vmem:[#allocation7 + $0x18] sm:$0xff]
    %v55 = vld [vmem:[#allocation7 + $0x20] sm:$0xff]
    %v56 = vld [vmem:[#allocation7 + $0x28] sm:$0xff]
    %v57 = vld [vmem:[#allocation7 + $0x30] sm:$0xff]
    %v58 = vld [vmem:[#allocation7 + $0x38] sm:$0xff]
    %v59 = vld [vmem:[#allocation7 + $0x40] sm:$0xff]
    %v60 = vld [vmem:[#allocation7 + $0x48] sm:$0xff]
    %v61 = vld [vmem:[#allocation7 + $0x50] sm:$0xff]
    %v62 = vld [vmem:[#allocation7 + $0x58] sm:$0xff]
    %v63 = vld [vmem:[#allocation7 + $0x60] sm:$0xff]
    %v64 = vld [vmem:[#allocation7 + $0x68] sm:$0xff]
    %v65 = vld [vmem:[#allocation7 + $0x70] sm:$0xff]
    %v66 = vld [vmem:[#allocation7 + $0x78] sm:$0xff]
    %v67 = vld [vmem:[#allocation2] sm:$0xff]
    %vm68 = vcmask 261120
    %v70 = vsel %vm68, %v50, 0
    %v73 = vsel %vm68, %v51, 0
    %v76 = vsel %vm68, %v52, 0
    %v79 = vsel %vm68, %v53, 0
    %v82 = vsel %vm68, %v54, 0
    %v85 = vsel %vm68, %v55, 0
    %v88 = vsel %vm68, %v56, 0
    %v91 = vsel %vm68, %v57, 0
    %v94 = vsel %vm68, %v58, 0
    %v97 = vsel %vm68, %v59, 0
    %v100 = vsel %vm68, %v60, 0
    %v103 = vsel %vm68, %v61, 0
    %v106 = vsel %vm68, %v62, 0
    %v109 = vsel %vm68, %v63, 0
    %v112 = vsel %vm68, %v64, 0
    %v115 = vsel %vm68, %v65, 0
    %v118 = vsel %vm68, %v66, 0
    %120 = vmatprep.subr.mxu0 0.0
    %121 = vmatpush1.xpose.msra.mxu0 %v73
    %122 = vmatprep.subr.mxu0 0.0
    %123 = vmatpush1.xpose.msra.mxu0 %v76
    %124 = vmatprep.subr.mxu0 0.0
    %125 = vmatpush1.xpose.msra.mxu0 %v79
    %126 = vmatprep.subr.mxu0 0.0
    %127 = vmatpush1.xpose.msra.mxu0 %v82
    %128 = vmatprep.subr.mxu0 0.0
    %129 = vmatpush1.xpose.msra.mxu0 %v85
    %130 = vmatprep.subr.mxu0 0.0
    %131 = vmatpush1.xpose.msra.mxu0 %v88
    %132 = vmatprep.subr.mxu0 0.0
    %133 = vmatpush1.xpose.msra.mxu0 %v91
    %134 = vmatprep.subr.mxu0 0.0
    %135 = vmatpush1.xpose.msra.mxu0 %v94
    %136 = vmatprep.subr.mxu0 0.0
    %137 = vmatpush1.xpose.msra.mxu0 %v97
    %138 = vmatprep.subr.mxu0 0.0
    %139 = vmatpush1.xpose.msra.mxu0 %v100
    %140 = vmatprep.subr.mxu0 0.0
    %141 = vmatpush1.xpose.msra.mxu0 %v103
    %142 = vmatprep.subr.mxu0 0.0
    %143 = vmatpush1.xpose.msra.mxu0 %v106
    %144 = vmatprep.subr.mxu0 0.0
    %145 = vmatpush1.xpose.msra.mxu0 %v109
    %146 = vmatprep.subr.mxu0 0.0
    %147 = vmatpush1.xpose.msra.mxu0 %v112
    %148 = vmatprep.subr.mxu0 0.0
    %149 = vmatpush1.xpose.msra.mxu0 %v115
    %150 = vmatprep.subr.mxu0 0.0
    %151 = vmatpush1.xpose.msra.mxu0 %v118
    %152 = vmatprep.subr.mxu0 0.0
    %153 = vmatpush1.xpose.msra.mxu0 0.0
    %154 = vmatprep.subr.mxu0 0.0
    %155 = vmatpush1.xpose.msra.mxu0 0.0
    %156 = vmatprep.subr.mxu0 0.0
    %157 = vmatpush1.xpose.msra.mxu0 0.0
    %158 = vmatprep.subr.mxu0 0.0
    %159 = vmatpush1.xpose.msra.mxu0 0.0
    %160 = vmatprep.subr.mxu0 0.0
    %161 = vmatpush1.xpose.msra.mxu0 0.0
    %162 = vmatprep.subr.mxu0 0.0
    %163 = vmatpush1.xpose.msra.mxu0 0.0
    %164 = vmatprep.subr.mxu0 0.0
    %165 = vmatpush1.xpose.msra.mxu0 0.0
    %166 = vmatprep.subr.mxu0 0.0
    %167 = vmatpush1.xpose.msra.mxu0 0.0
    %168 = vmatprep.subr.mxu0 0.0
    %169 = vmatpush1.xpose.msra.mxu0 0.0
    %170 = vmatprep.subr.mxu0 0.0
    %171 = vmatpush1.xpose.msra.mxu0 0.0
    %172 = vmatprep.subr.mxu0 0.0
    %173 = vmatpush1.xpose.msra.mxu0 0.0
    %174 = vmatprep.subr.mxu0 0.0
    %175 = vmatpush1.xpose.msra.mxu0 0.0
    %176 = vmatprep.subr.mxu0 0.0
    %177 = vmatpush1.xpose.msra.mxu0 0.0
    %178 = vmatprep.subr.mxu0 0.0
    %179 = vmatpush1.xpose.msra.mxu0 0.0
    %180 = vmatprep.subr.mxu0 0.0
    %181 = vmatpush1.xpose.msra.mxu0 0.0
    %182 = vmatprep.subr.mxu0 0.0
    %183 = vmatpush1.xpose.msra.mxu0 0.0
    %184 = vmatprep.mubr.f32.mxu0 0.0
    %185 = vmatmul.mubr.f32.gmra.mrb[0].mxu0 %v70
    %v186 = vpop.f32.mrb[0].mxu0
    %v187 = vadd.f32 0.0, %v186
    %v188 = vpop.f32.mrb[0].mxu0
    %189 = vdwg.mxu0
    %v190 = vadd.f32 %v67, %v187
    %191 = vst [vmem:[#allocation2] sm:$0xff] %v190
    // Predicated region
    $region30: #{tpu_custom_call.1} parent=1 // pred_check
      %p192 = pneg %p45
    $region31: #{tpu_custom_call.1} parent=1 // pred_check_branch
      %194 = sbr.rel (%p192) target = $region33
    $region32: #{tpu_custom_call.1} parent=1 // pred_region
      %v195 = vld [vmem:[#allocation2] sm:$0xff]
      %v196 = vld [vmem:[%s3] sm:$0x1]
      %v198 = vlaneseq
      %v199 = vshrl.u32 %v198, 7
      %v200 = vsub.s32 0, %v199
      %v201 = vrot.slane %v196, %v200
      %v203 = vadd.f32 %v195, %v201
      %s204 = sld [smem:[#allocation3]]
      %v205 = vstv %s204
      %v206 = vmul.f32 %v203, %v205
      %207 = vst [vmem:[#allocation9] sm:$0xff] %v206
    $region33: #{tpu_custom_call.1} parent=1 // pred_fallthru
      _
    // Predicated region
    $region34: #{tpu_custom_call.1} parent=1 // pred_check
      _
    $region35: #{tpu_custom_call.1} parent=1 // pred_check_branch
      %209 = sbr.rel (0) target = $region37
    $region36: #{tpu_custom_call.1} parent=1 // pred_region
      %s211 = ssub.s32 128, 128
      %212 = vsyncadd [#allocation6], %s211
      %s214 = sshll.u32 [#allocation9], 4
      %s215 = int_to_ptr.vmem [resolvable:$true] %s214
      %217 = dma.vmem_to_hbm [thread:$0]  %s215, 128, %s4, [#allocation6]
    $region37: #{tpu_custom_call.1} parent=1 // pred_fallthru
      _
    // Predicated region
    $region38: #{tpu_custom_call.1} parent=1 // pred_check
      _
    $region39: #{tpu_custom_call.1} parent=1 // pred_check_branch
      %219 = sbr.rel (0) target = $region41
    $region40: #{tpu_custom_call.1} parent=1 // pred_region
      %220 = dma.done [#allocation6], 128
    $region41: #{tpu_custom_call.1} parent=1 // pred_fallthru
      _
    %221 = vsyncpa [#allocation5], 1
    %222 = vsyncpa [#allocation8], 1
    %223 = vsyncpa [#allocation6], 1

</llo_original>
